<compile_context>
chip_gen: v5e
topology: v5e:2x2
jax: 0.10.0
libtpu: 0.0.40
codegen_flags: <defaults>
</compile_context>

<pallas_src>
import functools
import math

import jax
import jax.numpy as jnp
import numpy as np
from jax import lax
from jax.experimental import pallas as pl
from jax.experimental.pallas import tpu as pltpu


def _round_up(x, m):
    return (x + m - 1) // m * m


def _cdiv(a, b):
    return -(-a // b)


_DEFAULT_VMEM_LIMIT = 32 * 1024 * 1024


# ----------------------------------------------------------------------------
# Pallas kernel 1: fused split Linear + bias + ReLU
#   out = relu(x_feat @ W_feat + x_edge @ W_edge + b)
# ----------------------------------------------------------------------------
def _split_linear_relu_kernel(xf_ref, xe_ref, wf_ref, we_ref, b_ref, o_ref):
    # Two small-K MXU pushes accumulated in f32; bias + ReLU epilogue in f32.
    acc = jnp.dot(xf_ref[...], wf_ref[...], preferred_element_type=jnp.float32)
    acc = acc + jnp.dot(xe_ref[...], we_ref[...], preferred_element_type=jnp.float32)
    acc = acc + b_ref[...]
    o_ref[...] = jnp.maximum(acc, 0.0).astype(o_ref.dtype)


def _linear_vmem_bytes(tm, df, de, dout, act_bytes, w_bytes, out_bytes):
    """Lane-padded, double-buffered VMEM footprint estimate for one grid step."""
    lane, sub = 128, 8
    pad_l = lambda d: _round_up(max(d, 1), lane)
    pad_s = lambda d: _round_up(max(d, 1), sub)
    streaming = 2 * tm * (pad_l(df) * act_bytes + pad_l(de) * act_bytes
                          + pad_l(dout) * out_bytes)
    resident = 2 * (pad_s(df) * pad_l(dout) * w_bytes
                    + pad_s(de) * pad_l(dout) * w_bytes
                    + sub * pad_l(dout) * 4)
    return streaming + resident


def fused_linear_relu(x_feat, x_edge, w_feat, w_edge, b, *,
                      tm=2048, compute_dtype=jnp.float32, out_dtype=None,
                      target_row_steps=4, vmem_budget=48 * 1024 * 1024):
    """relu(x_feat @ w_feat + x_edge @ w_edge + b), f32 accumulate + epilogue.

    x_feat: (R, Df), x_edge: (R, De), w_*: (D*, Dout), b: (Dout,) -> (R, Dout).
    """
    R, Df = x_feat.shape
    De = x_edge.shape[1]
    Dout = w_feat.shape[1]
    out_dtype = x_feat.dtype if out_dtype is None else out_dtype

    # Stream activations / hold weights in compute_dtype (bf16 halves the HBM
    # read bytes on v6e/v7x); bias stays f32 for the exact epilogue.
    x_feat = x_feat.astype(compute_dtype)
    x_edge = x_edge.astype(compute_dtype)
    w_feat = w_feat.astype(compute_dtype)
    w_edge = w_edge.astype(compute_dtype)
    b2 = b.reshape(1, Dout).astype(jnp.float32)

    act_bytes = jnp.dtype(compute_dtype).itemsize
    out_bytes = jnp.dtype(out_dtype).itemsize
    align = 16 if (act_bytes == 2 or out_bytes == 2) else 8  # bf16 packs (16,128)

    # Row tile: as large as possible, but keep >= target_row_steps grid steps
    # so the ("parallel",) row axis gives both v7x TensorCores work.
    TM = max(align, min(tm, _round_up(_cdiv(R, target_row_steps), align)))
    while (_linear_vmem_bytes(TM, Df, De, Dout, act_bytes, act_bytes, out_bytes)
           > vmem_budget and TM > align):
        TM = max(align, _round_up(TM // 2, align))

    R_pad = _round_up(R, TM)
    if R_pad != R:
        x_feat = jnp.pad(x_feat, ((0, R_pad - R), (0, 0)))
        x_edge = jnp.pad(x_edge, ((0, R_pad - R), (0, 0)))
    grid = (R_pad // TM,)

    vmem_est = _linear_vmem_bytes(TM, Df, De, Dout, act_bytes, act_bytes, out_bytes)
    vmem_limit = max(_DEFAULT_VMEM_LIMIT, int(1.25 * vmem_est))

    out = pl.pallas_call(
        _split_linear_relu_kernel,
        out_shape=jax.ShapeDtypeStruct((R_pad, Dout), out_dtype),
        grid=grid,
        in_specs=[
            pl.BlockSpec((TM, Df), lambda i: (i, 0)),       # activations (streamed)
            pl.BlockSpec((TM, De), lambda i: (i, 0)),
            pl.BlockSpec((Df, Dout), lambda i: (0, 0)),     # weights (resident)
            pl.BlockSpec((De, Dout), lambda i: (0, 0)),
            pl.BlockSpec((1, Dout), lambda i: (0, 0)),      # bias (resident, f32)
        ],
        # Output emitted at the true d_model (last dim == full array dim): the
        # masked vst is far cheaper than a 4x padded write + post-kernel slice.
        out_specs=pl.BlockSpec((TM, Dout), lambda i: (i, 0)),
        compiler_params=pltpu.CompilerParams(
            dimension_semantics=("parallel",),
            vmem_limit_bytes=vmem_limit),
    )(x_feat, x_edge, w_feat, w_edge, b2)
    return out if R_pad == R else out[:R]


# ----------------------------------------------------------------------------
# Pallas kernel 2: adjacency "compress" (stride == 1 path), batched over the
# leading dims:
#   upper = triu(adj, fs)[..., :n, fs-1:]
#   lower = tril(adj, -fs)[..., fs-1:, :n]
#   out   = upper + lower                       -> [..., n, n]
# ----------------------------------------------------------------------------
def _adj_compress_kernel(adj_ref, out_ref, *, n, fs):
    # adj_ref: (Lb, M, M), out_ref: (Lb, n, n) with M = n + fs - 1.
    a = adj_ref[...]
    upper = a[:, :n, fs - 1:fs - 1 + n]       # out[l,r,c] <- adj[l, r, c + fs - 1]
    lower = a[:, fs - 1:fs - 1 + n, :n]       # out[l,r,c] <- adj[l, r + fs - 1, c]
    # 2-D masks broadcast along the Lb axis (identical for every matrix).
    row = lax.broadcasted_iota(jnp.int32, (n, n), 0)
    col = lax.broadcasted_iota(jnp.int32, (n, n), 1)
    keep_up = (col - row >= 1)[None]          # triu(fs): (c+fs-1) - r >= fs
    keep_lo = (row - col >= 1)[None]          # tril(-fs): (r+fs-1) - c >= fs
    up = jnp.where(keep_up, upper, jnp.zeros_like(upper))
    lo = jnp.where(keep_lo, lower, jnp.zeros_like(lower))
    out_ref[...] = (up + lo).astype(out_ref.dtype)


def compress_adj_stride1(adj, n, fs, *, lb=64):
    """adj: [..., M, M] with M = n + fs - 1  ->  [..., n, n]."""
    # TODO(synk): for large L a lane-dense layout (L on the 128-lane axis) would
    # avoid the ~10-element lane occupancy and masked stores; at the small L
    # this module sees, the op is launch-overhead dominated either way.
    lead = adj.shape[:-2]
    M = adj.shape[-1]
    L = int(np.prod(lead)) if lead else 1
    adj_flat = adj.reshape(L, M, M)

    # Cap Lb so the grid has >= 2 steps when L > 1 (v7x 2-TC utilization).
    Lb = 1 if L <= 1 else min(lb, _cdiv(L, 2))
    L_pad = _round_up(L, Lb)
    if L_pad != L:
        adj_flat = jnp.pad(adj_flat, ((0, L_pad - L), (0, 0), (0, 0)))

    out = pl.pallas_call(
        functools.partial(_adj_compress_kernel, n=n, fs=fs),
        out_shape=jax.ShapeDtypeStruct((L_pad, n, n), adj.dtype),
        grid=(L_pad // Lb,),
        in_specs=[pl.BlockSpec((Lb, M, M), lambda i: (i, 0, 0))],
        out_specs=pl.BlockSpec((Lb, n, n), lambda i: (i, 0, 0)),
        compiler_params=pltpu.CompilerParams(
            dimension_semantics=("parallel",)),
    )(adj_flat)
    out = out if L_pad == L else out[:L]
    return out.reshape(*lead, n, n)


# ----------------------------------------------------------------------------
# Module wrapper (parameter setup + glue in plain JAX)
# ----------------------------------------------------------------------------
class SparseCompressConvolution:
    """JAX/Pallas port of the PyTorch SparseCompressConvolution forward pass."""

    def __init__(self, d_ein, d_in, d_model, filter_size, stride, dropout, key,
                 compute_dtype=jnp.float32, row_tile=2048):
        self.filter_size = filter_size
        self.stride = stride
        self.d_in = d_in
        self.d_model = d_model
        self.dropout = dropout
        # compute_dtype: set jnp.bfloat16 on v6e/v7x to halve activation/weight
        # HBM reads (f32 default keeps exact nn.Linear parity).
        self.compute_dtype = compute_dtype
        self.row_tile = row_tile

        self.d_feat = filter_size * d_in
        self.d_edge = filter_size * (filter_size - 1) * d_ein
        din = self.d_feat + self.d_edge
        bound = 1.0 / math.sqrt(din)
        kw, kb = jax.random.split(key)
        # nn.Linear-style U(-1/sqrt(fan_in), 1/sqrt(fan_in)) init.
        self.w = jax.random.uniform(kw, (din, d_model), jnp.float32, -bound, bound)
        self.b = jax.random.uniform(kb, (d_model,), jnp.float32, -bound, bound)
        # Pre-split (so no HBM concat of the activations is ever needed) and
        # pre-cast the resident weights once instead of every grid step.
        self.w_feat = self.w[:self.d_feat].astype(compute_dtype)
        self.w_edge = self.w[self.d_feat:].astype(compute_dtype)

    def __call__(self, adj, features, edge_features):
        if edge_features is None:
            # The PyTorch reference also fails on None (torch.cat with None);
            # fail loudly instead of crashing mid-way.
            raise ValueError("SparseCompressConvolution requires edge_features")

        fs = self.filter_size
        n = edge_features.shape[2]
        if self.stride > 1:
            # TODO(synk): strided unfold+max path is a plain-JAX reduce_window
            # fallback, not a Pallas kernel (stride == 1 is the configured path).
            window = (1,) * (adj.ndim - 2) + (fs, fs)
            strides = (1,) * (adj.ndim - 2) + (self.stride, self.stride)
            adj = lax.reduce_window(adj, jnp.array(-jnp.inf, adj.dtype), lax.max,
                                    window, strides, "VALID")
        else:
            adj = compress_adj_stride1(adj, n, fs)

        # Flatten the (filter_size, d_in) tail of features; keep the two
        # activation streams separate (an HBM concat would add a full
        # read+write round trip for a memory-bound op).
        feat = features.reshape(*features.shape[:-2], -1)
        lead = feat.shape[:-1]
        xf = feat.reshape(-1, self.d_feat)
        xe = edge_features.reshape(-1, self.d_edge)

        out = fused_linear_relu(xf, xe, self.w_feat, self.w_edge, self.b,
                                tm=self.row_tile,
                                compute_dtype=self.compute_dtype,
                                out_dtype=features.dtype)
        out = out.reshape(*lead, self.d_model)
        # TODO(synk): nn.Dropout is identity in eval mode (no-op here); training
        # dropout would use pltpu.prng_seed / pltpu.prng_random_bits in-kernel.
        return adj, out


# ----------------------------------------------------------------------------
# Pure-JAX reference for correctness check
# ----------------------------------------------------------------------------
def reference_forward(module, adj, features, edge_features):
    fs = module.filter_size
    n = edge_features.shape[2]
    M = adj.shape[-1]
    triu_mask = jnp.triu(jnp.ones((M, M), adj.dtype), fs)
    tril_mask = jnp.tril(jnp.ones((M, M), adj.dtype), -fs)
    upper = (adj * triu_mask)[..., :n, fs - 1:]
    lower = (adj * tril_mask)[..., fs - 1:, :n]
    adj_out = upper + lower
    feat = jnp.concatenate(
        [features.reshape(*features.shape[:-2], -1), edge_features], axis=-1)
    out = jnp.maximum(jnp.einsum("...d,de->...e", feat, module.w) + module.b, 0.0)
    return adj_out, out


if __name__ == "__main__":
    key = jax.random.PRNGKey(0)
    d_ein, d_in, d_model = 2, 4, 32
    filter_size, stride, dropout_p = 3, 1, 0.0
    B, C, n = 2, 4, 16
    M = n + filter_size - 1  # 18

    k_adj, k_feat, k_edge, k_param = jax.random.split(key, 4)
    adj = jax.random.uniform(k_adj, (B, C, 1, M, M), jnp.float32)
    features = jax.random.normal(k_feat, (B, C, n, filter_size, d_in), jnp.float32)
    edge_features = jax.random.normal(
        k_edge, (B, C, n, filter_size * (filter_size - 1) * d_ein), jnp.float32)

    module = SparseCompressConvolution(
        d_ein, d_in, d_model, filter_size, stride, dropout_p, k_param,
        compute_dtype=jnp.float32)   # f32 operands -> exact nn.Linear parity

    adj_out, out = module(adj, features, edge_features)
    jax.block_until_ready((adj_out, out))

    adj_ref, out_ref = reference_forward(module, adj, features, edge_features)
    np.testing.assert_allclose(np.asarray(adj_out), np.asarray(adj_ref),
                               rtol=1e-5, atol=1e-5)
    np.testing.assert_allclose(np.asarray(out), np.asarray(out_ref),
                               rtol=1e-5, atol=1e-5)

    print("KERNEL_OK")
</pallas_src>

<mosaic_0001>
module attributes {stable_mosaic.version = 11 : i64} {
  func.func @_adj_compress_kernel(%arg0: i32, %arg1: memref<4x18x18xf32, #tpu.memory_space<vmem>>, %arg2: memref<4x16x16xf32, #tpu.memory_space<vmem>>) attributes {dimension_semantics = [#tpu.dimension_semantics<parallel>], iteration_bounds = array<i64: 2>, scalar_prefetch = 0 : i64, scratch_operands = 0 : i64, tpu.core_type = #tpu.core_type<tc>, window_params = [{transform_indices = @transform_0, window_bounds = array<i64: 4, 18, 18>}, {transform_indices = @transform_1, window_bounds = array<i64: 4, 16, 16>}]} {
    %c0 = arith.constant 0 : index
    %c0_0 = arith.constant 0 : index
    %c0_1 = arith.constant 0 : index
    %0 = vector.load %arg1[%c0, %c0_0, %c0_1] : memref<4x18x18xf32, #tpu.memory_space<vmem>>, vector<4x18x18xf32>
    %1 = vector.extract_strided_slice %0 {offsets = [0, 0, 2], sizes = [4, 16, 16], strides = [1, 1, 1]} : vector<4x18x18xf32> to vector<4x16x16xf32>
    %2 = vector.extract_strided_slice %0 {offsets = [0, 2, 0], sizes = [4, 16, 16], strides = [1, 1, 1]} : vector<4x18x18xf32> to vector<4x16x16xf32>
    %3 = tpu.iota {dimensions = array<i32: 0>} : vector<16x16xi32>
    %4 = tpu.iota {dimensions = array<i32: 1>} : vector<16x16xi32>
    %5 = arith.subi %4, %3 : vector<16x16xi32>
    %c1_i32 = arith.constant 1 : i32
    %6 = vector.broadcast %c1_i32 : i32 to vector<16x16xi32>
    %7 = arith.cmpi sge, %5, %6 : vector<16x16xi32>
    %8 = vector.shape_cast %7 : vector<16x16xi1> to vector<1x16x16xi1>
    %9 = arith.subi %3, %4 : vector<16x16xi32>
    %c1_i32_2 = arith.constant 1 : i32
    %10 = vector.broadcast %c1_i32_2 : i32 to vector<16x16xi32>
    %11 = arith.cmpi sge, %9, %10 : vector<16x16xi32>
    %12 = vector.shape_cast %11 : vector<16x16xi1> to vector<1x16x16xi1>
    %cst = arith.constant 0.000000e+00 : f32
    %13 = vector.broadcast %cst : f32 to vector<4x16x16xf32>
    %14 = vector.shape_cast %8 : vector<1x16x16xi1> to vector<1x16x16xi1>
    %15 = vector.broadcast %14 : vector<1x16x16xi1> to vector<4x16x16xi1>
    %16 = arith.select %15, %1, %13 : vector<4x16x16xi1>, vector<4x16x16xf32>
    %cst_3 = arith.constant 0.000000e+00 : f32
    %17 = vector.broadcast %cst_3 : f32 to vector<4x16x16xf32>
    %18 = vector.shape_cast %12 : vector<1x16x16xi1> to vector<1x16x16xi1>
    %19 = vector.broadcast %18 : vector<1x16x16xi1> to vector<4x16x16xi1>
    %20 = arith.select %19, %2, %17 : vector<4x16x16xi1>, vector<4x16x16xf32>
    %21 = arith.addf %16, %20 : vector<4x16x16xf32>
    %c0_4 = arith.constant 0 : index
    %c0_5 = arith.constant 0 : index
    %c0_6 = arith.constant 0 : index
    %22 = vector.load %arg2[%c0_4, %c0_5, %c0_6] : memref<4x16x16xf32, #tpu.memory_space<vmem>>, vector<4x16x16xf32>
    tpu.vector_store %arg2[%c0_4, %c0_5, %c0_6], %21 {strides = array<i32>} : memref<4x16x16xf32, #tpu.memory_space<vmem>>, vector<4x16x16xf32>,
    return
  }
  func.func @transform_0(%arg0: i32) -> (i32, i32, i32) {
    %c0_i32 = arith.constant 0 : i32
    %c0_i32_0 = arith.constant 0 : i32
    %c0_i32_1 = arith.constant 0 : i32
    return %arg0, %c0_i32, %c0_i32_0 : i32, i32, i32
  }
  func.func @transform_1(%arg0: i32) -> (i32, i32, i32) {
    %c0_i32 = arith.constant 0 : i32
    %c0_i32_0 = arith.constant 0 : i32
    %c0_i32_1 = arith.constant 0 : i32
    return %arg0, %c0_i32, %c0_i32_0 : i32, i32, i32
  }
}

</mosaic_0001>

<llo_original>
// kernel: tpu_custom_call.1
$region0: #{tpu_custom_call.1}
  #allocation0 [shape = 'u32[]', space=smem, size = 0x4, offset = 0x4, fixed_abs, tag = 'smem constant byte address 0x4 - core index']
  #allocation1 [shape = 'u32[72,128]{1,0:T(1,128)}', space=vmem, size = 0x9000, scoped, tag = 'internal scratch']
  %s0 = inlined_call_operand.vmem [shape: f32[8,18,18], index: 0, kind: input, shape index: {}]
  %s1 = inlined_call_operand.hbm [shape: f32[8,16,16], index: 1, kind: output, shape index: {}]
  %s2 = sld [smem:[#allocation0]]
  $region37: #{tpu_custom_call.1} parent=0
    _
  %s4 = ssub.s32 1, %s2
  %s5 = scalar_select 0, %s4, %s2
  $region1: #{tpu_custom_call.1} parent=0
    #allocation2 [shape = 'u8[65536]{0}', space=vmem, size = 0x10000, scoped, tag = 'output window, operand 0']
    #allocation3 [shape = 's32[2]{0}', space=sflag, size = 0x8, scoped, tag = 'scoped memory for tpu_custom_call.1']
    %6 = vsyncpa [#allocation3], 0
    %s7 = scalar_lea.sflag [#allocation3], 1
    %8 = vsyncpa %s7, 0
    loop: start=0, step=1, limit=4
    $region2: #{tpu_custom_call.1} parent=1 // loop_pre_header
      _
    $region3: #{tpu_custom_call.1} parent=1 // loop_header
      %s10 = sphi 0, %s14
      %p11 = scmp.ge.s32.totalorder %s10, 4
      %s20 = sphi 0, %s22
      %s23 = sphi 0, %s20
      %s24 = sphi 0, %s23
      %s40 = sphi 0, %s24
      %s46 = sphi 0, %s48
      %s49 = sphi 0, %s46
      %s50 = sphi 0, %s49
      %s66 = sphi 0, %s50
    $region4: #{tpu_custom_call.1} parent=1 // loop_header_branch
      %13 = sbr.rel (%p11) target = $region8
    $region5: #{tpu_custom_call.1} parent=1 // loop_body
      %s15 = ssub.s32 %s10, 1
      %s16 = ssub.s32 %s10, 2
      %s17 = sadd.s32 %s10, 1
      %s18 = ssub.s32 %s10, %s17
      %p19 = scmp.eq.s32.totalorder %s18, 0
      %s21 = sadd.s32 %s20, 1
      %s22 = scalar_select %p19, %s20, %s21
      %p25 = pneg %p19
      %p26 = scmp.eq.s32.totalorder %s10, 1
      %p27 = por %p25, %p26
      %p28 = scmp.ne.s32.totalorder %s20, %s23
      %p29 = scmp.eq.s32.totalorder %s10, 0
      %p30 = por %p28, %p29
      %p31 = scmp.ne.s32.totalorder %s20, %s23
      %p32 = scmp.eq.s32.totalorder %s15, 1
      %p33 = por %p31, %p32
      %p34 = scmp.ne.s32.totalorder %s23, %s24
      %p35 = scmp.eq.s32.totalorder %s15, 0
      %p36 = por %p34, %p35
      %p37 = scmp.ne.s32.totalorder %s23, %s24
      %p38 = scmp.eq.s32.totalorder %s16, 1
      %p39 = por %p37, %p38
      %p41 = scmp.ne.s32.totalorder %s24, %s40
      %p42 = scmp.eq.s32.totalorder %s16, 0
      %p43 = por %p41, %p42
      %s44 = ssub.s32 %s10, %s17
      %p45 = scmp.eq.s32.totalorder %s44, 0
      %s47 = sadd.s32 %s46, 1
      %s48 = scalar_select %p45, %s46, %s47
      %p51 = pneg %p45
      %p52 = scmp.eq.s32.totalorder %s10, 1
      %p53 = por %p51, %p52
      %p54 = scmp.ne.s32.totalorder %s46, %s49
      %p55 = scmp.eq.s32.totalorder %s10, 0
      %p56 = por %p54, %p55
      %p57 = scmp.ne.s32.totalorder %s46, %s49
      %p58 = scmp.eq.s32.totalorder %s15, 1
      %p59 = por %p57, %p58
      %p60 = scmp.ne.s32.totalorder %s49, %s50
      %p61 = scmp.eq.s32.totalorder %s15, 0
      %p62 = por %p60, %p61
      %p63 = scmp.ne.s32.totalorder %s49, %s50
      %p64 = scmp.eq.s32.totalorder %s16, 1
      %p65 = por %p63, %p64
      %p67 = scmp.ne.s32.totalorder %s50, %s66
      %p68 = scmp.eq.s32.totalorder %s16, 0
      %p69 = por %p67, %p68
      %p70 = scmp.le.s32.totalorder 1, %s10
      %p71 = scmp.lt.s32.totalorder %s10, 3
      %p72 = pnand %p70, %p71
      %p73 = pneg %p72
      // Predicated region
      $region9: #{tpu_custom_call.1} parent=5 // pred_check
        _
      $region10: #{tpu_custom_call.1} parent=5 // pred_check_branch
        %75 = sbr.rel (%p72) target = $region12
      $region11: #{tpu_custom_call.1} parent=5 // pred_region
        %s76 = ssub.s32 %s10, 1
      $region12: #{tpu_custom_call.1} parent=5 // pred_fallthru
        _
      %p77 = scmp.lt.s32.totalorder %s10, 2
      // Predicated region
      $region13: #{tpu_custom_call.1} parent=5 // pred_check
        %p78 = pneg %p77
      $region14: #{tpu_custom_call.1} parent=5 // pred_check_branch
        %80 = sbr.rel (%p78) target = $region16
      $region15: #{tpu_custom_call.1} parent=5 // pred_region
        // Predicated region
        $region17: #{tpu_custom_call.1} parent=15 // pred_check
          %p81 = pneg %p30
        $region18: #{tpu_custom_call.1} parent=15 // pred_check_branch
          %83 = sbr.rel (%p81) target = $region20
        $region19: #{tpu_custom_call.1} parent=15 // pred_region
          %s84 = smul.u32 4, %s10
          %p85 = scmp.lt.s32.totalorder %s84, 7
          %s86 = scalar_select %p85, %s84, 7
          %s87 = smul.addr %s86, 3
          %s88 = smul.addr %s87, 8
          %s89 = scalar_lea.vmem %s0, %s88
          %s90 = smul.u32 4, %s10
        $region20: #{tpu_custom_call.1} parent=15 // pred_fallthru
          _
      $region16: #{tpu_custom_call.1} parent=5 // pred_fallthru
        _
      %p91 = scmp.le.s32.totalorder 1, %s10
      %p92 = scmp.lt.s32.totalorder %s10, 3
      %p93 = pnand %p91, %p92
      %p94 = pneg %p93
      // Predicated region
      $region21: #{tpu_custom_call.1} parent=5 // pred_check
        _
      $region22: #{tpu_custom_call.1} parent=5 // pred_check_branch
        %96 = sbr.rel (%p93) target = $region24
      $region23: #{tpu_custom_call.1} parent=5 // pred_region
        %s97 = ssub.s32 %s10, 1
        %s98 = smul.u32 4, %s15
        %p99 = scmp.lt.s32.totalorder %s98, 7
        %s100 = scalar_select %p99, %s98, 7
        %s101 = smul.addr %s100, 3
        %s102 = smul.addr %s101, 8
        %s103 = scalar_lea.vmem %s0, %s102
        %p104 = pneg %p36
        %p105 = pneg %p33
        %p106 = pneg %p62
        %p107 = pneg %p59
        %s108 = sand.u32 %s49, 1
        %s109 = scalar_lea.sflag [#allocation3], %s108
        %s110 = sand.u32 %s49, 1
        %s111 = smul.addr %s110, 64
        %s112 = scalar_lea.vmem [#allocation2], %s111
        %s113 = smul.u32 4, %s15
        %p114 = scmp.lt.s32.totalorder %s113, 7
        %s115 = scalar_select %p114, %s113, 7
        %s116 = smul.addr %s115, 3
        %s117 = smul.addr %s116, 8
        %s118 = scalar_lea.vmem %s0, %s117
        %s119 = smul.u32 4, %s15
        %s120 = smul.u32 4, %s15
        %v121 = vld [vmem:[%s118] sm:$0xff]
        %v122 = vld [vmem:[%s118 + $0x8] sm:$0xff]
        %v123 = vld [vmem:[%s118 + $0x10] sm:$0x3]
        %v124 = vld [vmem:[%s118 + $0x18] sm:$0xff]
        %v125 = vld [vmem:[%s118 + $0x20] sm:$0xff]
        %v126 = vld [vmem:[%s118 + $0x28] sm:$0x3]
        %v127 = vld [vmem:[%s118 + $0x30] sm:$0xff]
        %v128 = vld [vmem:[%s118 + $0x38] sm:$0xff]
        %v129 = vld [vmem:[%s118 + $0x40] sm:$0x3]
        %v130 = vld [vmem:[%s118 + $0x48] sm:$0xff]
        %v131 = vld [vmem:[%s118 + $0x50] sm:$0xff]
        %v132 = vld [vmem:[%s118 + $0x58] sm:$0x3]
        %v133 = vlaneseq
        %v134 = vshrl.u32 %v133, 7
        %v135 = vadd.s32 %v134, 8
        %v136 = vlaneseq
        %v137 = vand.u32 %v136, 127
        %v138 = vsub.s32 %v137, %v134
        %v139 = vsub.s32 %v137, %v135
        %vm140 = vcmp.ge.s32.totalorder %v138, 1
        %vm141 = vcmp.ge.s32.totalorder %v139, 1
        %v142 = vsub.s32 %v134, %v137
        %v143 = vsub.s32 %v135, %v137
        %vm144 = vcmp.ge.s32.totalorder %v142, 1
        %vm145 = vcmp.ge.s32.totalorder %v143, 1
        %v146 = vsel %vm140, 1, 0
        %v147 = vsel %vm141, 1, 0
        %vm148 = vcmp.eq.s32.totalorder %v146, 1
        %vm149 = vcmp.eq.s32.totalorder %v147, 1
        %158 = vrot.lane.b32.xlu0 %v121, 126
        %v159 = vpop.permute.xlu0 %158
        %160 = vrot.lane.b32.xlu0 %v122, 126
        %v161 = vpop.permute.xlu0 %160
        %162 = vrot.lane.b32.xlu0 %v124, 126
        %v163 = vpop.permute.xlu0 %162
        %164 = vrot.lane.b32.xlu0 %v125, 126
        %v165 = vpop.permute.xlu0 %164
        %166 = vrot.lane.b32.xlu0 %v127, 126
        %v167 = vpop.permute.xlu0 %166
        %168 = vrot.lane.b32.xlu0 %v128, 126
        %v169 = vpop.permute.xlu0 %168
        %170 = vrot.lane.b32.xlu0 %v130, 126
        %v171 = vpop.permute.xlu0 %170
        %172 = vrot.lane.b32.xlu0 %v131, 126
        %v173 = vpop.permute.xlu0 %172
        %v182 = vsel %vm148, %v159, 0.0
        %v183 = vsel %vm149, %v161, 0.0
        %v184 = vsel %vm148, %v163, 0.0
        %v185 = vsel %vm149, %v165, 0.0
        %v186 = vsel %vm148, %v167, 0.0
        %v187 = vsel %vm149, %v169, 0.0
        %v188 = vsel %vm148, %v171, 0.0
        %v189 = vsel %vm149, %v173, 0.0
        %v190 = vsel %vm144, 1, 0
        %v191 = vsel %vm145, 1, 0
        %vm192 = vcmp.eq.s32.totalorder %v190, 1
        %vm193 = vcmp.eq.s32.totalorder %v191, 1
        %vm198 = vcmask 1045504
        %v199 = vrot.slane %v121, 2
        %v200 = vrot.slane %v122, 2
        %v201 = vsel %vm198, %v199, %v200
        %v202 = vrot.slane %v123, 2
        %v203 = vsel %vm198, %v200, %v202
        %v204 = vrot.slane %v124, 2
        %v205 = vrot.slane %v125, 2
        %v206 = vsel %vm198, %v204, %v205
        %v207 = vrot.slane %v126, 2
        %v208 = vsel %vm198, %v205, %v207
        %v209 = vrot.slane %v127, 2
        %v210 = vrot.slane %v128, 2
        %v211 = vsel %vm198, %v209, %v210
        %v212 = vrot.slane %v129, 2
        %v213 = vsel %vm198, %v210, %v212
        %v214 = vrot.slane %v130, 2
        %v215 = vrot.slane %v131, 2
        %v216 = vsel %vm198, %v214, %v215
        %v217 = vrot.slane %v132, 2
        %v218 = vsel %vm198, %v215, %v217
        %v227 = vsel %vm192, %v201, 0.0
        %v228 = vsel %vm193, %v203, 0.0
        %v229 = vsel %vm192, %v206, 0.0
        %v230 = vsel %vm193, %v208, 0.0
        %v231 = vsel %vm192, %v211, 0.0
        %v232 = vsel %vm193, %v213, 0.0
        %v233 = vsel %vm192, %v216, 0.0
        %v234 = vsel %vm193, %v218, 0.0
        %v235 = vadd.f32 %v182, %v227
        %v236 = vadd.f32 %v183, %v228
        %v237 = vadd.f32 %v184, %v229
        %v238 = vadd.f32 %v185, %v230
        %v239 = vadd.f32 %v186, %v231
        %v240 = vadd.f32 %v187, %v232
        %v241 = vadd.f32 %v188, %v233
        %v242 = vadd.f32 %v189, %v234
        %vm243 = vcmask 130048
        %244 = vst.msk [vmem:[%s112] sm:$0xff] %vm243, %v235
        %245 = vst.msk [vmem:[%s112 + $0x8] sm:$0xff] %vm243, %v236
        %246 = vst.msk [vmem:[%s112 + $0x10] sm:$0xff] %vm243, %v237
        %247 = vst.msk [vmem:[%s112 + $0x18] sm:$0xff] %vm243, %v238
        %248 = vst.msk [vmem:[%s112 + $0x20] sm:$0xff] %vm243, %v239
        %249 = vst.msk [vmem:[%s112 + $0x28] sm:$0xff] %vm243, %v240
        %250 = vst.msk [vmem:[%s112 + $0x30] sm:$0xff] %vm243, %v241
        %251 = vst.msk [vmem:[%s112 + $0x38] sm:$0xff] %vm243, %v242
        %s252 = sand.u32 %s49, 1
        %s253 = scalar_lea.sflag [#allocation3], %s252
        %s254 = sand.u32 %s49, 1
        %s255 = smul.addr %s254, 64
        %s256 = scalar_lea.vmem [#allocation2], %s255
        // Predicated region
        $region25: #{tpu_custom_call.1} parent=23 // pred_check
          %p257 = pneg %p59
        $region26: #{tpu_custom_call.1} parent=23 // pred_check_branch
          %259 = sbr.rel (%p257) target = $region28
        $region27: #{tpu_custom_call.1} parent=23 // pred_region
          %s260 = smul.u32 4, %s15
          %262 = vsyncadd %s253, 0
          %s263 = smul.addr %s260, 2
          %s264 = smul.addr %s263, 8
          %s265 = scalar_lea.hbm %s1, %s264
          %s266 = sshll.u32 %s256, 4
          %s267 = int_to_ptr.vmem [resolvable:$true] %s266
          %s268 = sshll.u32 %s265, 4
          %s269 = int_to_ptr.hbm [resolvable:$true] %s268
          %274 = dma.vmem_to_hbm [thread:$0]  %s267, 1024, %s269, %s253, 128, 128, 8
        $region28: #{tpu_custom_call.1} parent=23 // pred_fallthru
          _
      $region24: #{tpu_custom_call.1} parent=5 // pred_fallthru
        _
      %p275 = scmp.le.s32.totalorder 2, %s10
      // Predicated region
      $region29: #{tpu_custom_call.1} parent=5 // pred_check
        %p276 = pneg %p275
      $region30: #{tpu_custom_call.1} parent=5 // pred_check_branch
        %278 = sbr.rel (%p276) target = $region32
      $region31: #{tpu_custom_call.1} parent=5 // pred_region
        %s279 = ssub.s32 %s10, 2
        // Predicated region
        $region33: #{tpu_custom_call.1} parent=31 // pred_check
          %p280 = pneg %p65
        $region34: #{tpu_custom_call.1} parent=31 // pred_check_branch
          %282 = sbr.rel (%p280) target = $region36
        $region35: #{tpu_custom_call.1} parent=31 // pred_region
          %s283 = sand.u32 %s50, 1
          %s284 = scalar_lea.sflag [#allocation3], %s283
          %s285 = sand.u32 %s50, 1
          %s286 = smul.addr %s285, 64
          %s287 = scalar_lea.vmem [#allocation2], %s286
          %289 = dma.done %s284, 1024
        $region36: #{tpu_custom_call.1} parent=31 // pred_fallthru
          _
      $region32: #{tpu_custom_call.1} parent=5 // pred_fallthru
        _
    $region6: #{tpu_custom_call.1} parent=1 // loop_footer
      %s14 = sadd.s32 1, %s10
    $region7: #{tpu_custom_call.1} parent=1 // loop_footer_branch
      %9 = sbr.rel target = $region3
    $region8: #{tpu_custom_call.1} parent=1 // loop_exit
      _
    %290 = vsyncpa [#allocation3], 1
    %s291 = scalar_lea.sflag [#allocation3], 1
    %292 = vsyncpa %s291, 1

</llo_original>
